<compile_context>
chip_gen: v6e
topology: v6e:2x2x1
jax: 0.10.0
libtpu: 0.0.40
codegen_flags: <defaults>
</compile_context>

<pallas_src>
import functools

import jax
import jax.numpy as jnp
from jax.experimental import pallas as pl
from jax.experimental.pallas import tpu as pltpu

LANE = 128  # TPU lane width


def _round_up(x, m):
    return ((x + m - 1) // m) * m


# ------------------------------ fused kernel -------------------------------

def fused_kernel(tracks_ref, attn_ref, x0_ref, a_ref,
                 w_in_ref, b_in_ref, w_head_ref, out_ref,
                 *, n_layer, feat_weight, double_hop, compute_dtype):
    """One feature-column block of the fused TreeTrackProcesser forward (eval).

    tracks_ref : (n, blk)        packed track slab block (compute_dtype, pre-padded)
    attn_ref   : (n, blk)        lane-broadcast attention slab block (f32)
    x0_ref     : (n, hidden)     node features (grid-invariant -> VMEM resident)
    a_ref      : (n, n)          bf16 gcn-normalized adjacency (or A@A), resident
    w_in_ref   : (hidden, blk)   input Linear weight, replicated across class slabs
    b_in_ref   : (1, blk)        input Linear bias, replicated across class slabs
    w_head_ref : (blk, out_pad)  class-sum + head-extractor folded matmul operand
    out_ref    : (1, n, out_pad) per-block partial output (summed in the wrapper)
    """
    f32 = jnp.float32
    bf16 = jnp.bfloat16
    fw = feat_weight

    # ---- input layer: Dropout(eval, identity) -> Linear -> ReLU --------------
    # w_in / b_in are replicated per class slab and zero in the pad lanes, so
    # this directly yields the packed-width init term (pad lanes stay 0).
    init = jnp.dot(x0_ref[...], w_in_ref[...], preferred_element_type=f32)
    init = jnp.maximum(init + b_in_ref[...], 0.0)
    init_blend = ((1.0 - fw) * init).astype(compute_dtype)     # (n, blk)

    a = a_ref[...]                      # bf16, pre-cast in the wrapper
    t = tracks_ref[...]                 # compute_dtype, packed + lane-padded

    # ---- layer_num x baseTrackConv ------------------------------------------
    # double_hop=True : t = fw * A @ (A @ t) + init_blend
    # double_hop=False: A already holds A@A -> one matmul per layer.
    for _ in range(n_layer):            # layer_num is static -> unrolled
        prod = jnp.dot(a, t.astype(bf16), preferred_element_type=compute_dtype)
        if double_hop:
            prod = jnp.dot(a, prod.astype(bf16),
                           preferred_element_type=compute_dtype)
        t = fw * prod + init_blend

    # ---- readout: attn-weighted class sum folded into the head matmul --------
    weighted = attn_ref[...] * t.astype(f32)                    # (n, blk) f32
    out_ref[0] = jnp.dot(weighted, w_head_ref[...], preferred_element_type=f32)


# ------------------------------- glue / model ------------------------------

def gcn_norm_dense(edge_index, n):
    """Dense symmetric gcn_norm with self-loops (edge_weight = 1)."""
    a = jnp.zeros((n, n), jnp.float32).at[edge_index[0], edge_index[1]].set(1.0)
    a = a + jnp.eye(n, dtype=jnp.float32)            # add_self_loops
    deg = a.sum(axis=1)
    dinv = jnp.where(deg > 0, 1.0 / jnp.sqrt(deg), 0.0)
    return dinv[:, None] * a * dinv[None, :]


def init_params(key, hidden, n_heads):
    k1, k2, k3, k4 = jax.random.split(key, 4)
    H = hidden * n_heads
    return {
        "w_in": 0.1 * jax.random.normal(k1, (hidden, H), jnp.float32),
        "b_in": 0.1 * jax.random.normal(k2, (1, H), jnp.float32),
        "w_ex": 0.1 * jax.random.normal(k3, (1, n_heads), jnp.float32),
        "b_ex": 0.1 * jax.random.normal(k4, (1, 1), jnp.float32),
    }


def _head_matrix(w_ex, b_ex, n_classes, heads, hidden, chp, out_pad):
    """Fold class-sum + Linear(n_heads, 1) into a single (chp, out_pad) operand.

    out[b, j] = sum_{c,e} attn[b,c] * w_ex[0,e] * t[b, c*H + e*hidden + j] + b_ex
    The attn factor is applied elementwise in the kernel; here we only set
    M[c*H + e*hidden + j, j] = w_ex[0, e] (replicated over c).  Pad rows are 0.
    For n_heads == 1 the PyTorch module skips the extractor -> identity embed.
    """
    H = heads * hidden
    f_idx = jnp.arange(n_classes * H)
    if heads == 1:
        cols = f_idx % H
        vals = jnp.ones((n_classes * H,), jnp.float32)
        bias = jnp.asarray(0.0, jnp.float32)
        out_dim = H
    else:
        within = f_idx % H                      # e*hidden + j
        cols = within % hidden                  # j
        vals = w_ex[0, within // hidden]        # w_ex: (1, n_heads)
        bias = b_ex[0, 0]
        out_dim = hidden
    mat = jnp.zeros((chp, out_pad), jnp.float32).at[f_idx, cols].set(vals)
    return mat, bias, out_dim


def tree_track_forward(params, cfg, track_h, attn, x0, a_norm):
    n = x0.shape[0]
    c = cfg["num_classes"]
    heads = cfg["n_heads"]
    hidden = cfg["hidden"]
    H = hidden * heads
    ch = c * H
    chp = _round_up(ch, LANE)                   # packed + padded feature width
    out_dim = hidden if heads != 1 else H
    out_pad = _round_up(out_dim, LANE)

    try:
        kind = jax.devices()[0].device_kind.lower()
    except Exception:  # pragma: no cover - defensive
        kind = ""
    # bf16 blend on v6e/v7x (bf16 VPU); f32 blend on v5e and older parts.
    compute_dtype = jnp.bfloat16 if ("v6" in kind or "v7" in kind) else jnp.float32
    # v7x has 2 TensorCores/chip -> split feature columns across a "parallel" grid.
    n_col_blocks = 2 if ("v7" in kind and chp % (2 * LANE) == 0) else 1
    blk = chp // n_col_blocks

    # ---- one-time, layout-only precomputes (outside the hot kernel) ----------
    tracks0 = jnp.transpose(track_h, (1, 0, 2)).reshape(n, ch)
    tracks0 = jnp.pad(tracks0, ((0, 0), (0, chp - ch))).astype(compute_dtype)
    attn_slab = jnp.pad(jnp.repeat(attn, H, axis=1), ((0, 0), (0, chp - ch)))
    w_in_rep = jnp.pad(jnp.tile(params["w_in"], (1, c)), ((0, 0), (0, chp - ch)))
    b_in_rep = jnp.pad(jnp.tile(params["b_in"], (1, c)), ((0, 0), (0, chp - ch)))
    w_head, b_head, _ = _head_matrix(params["w_ex"], params["b_ex"],
                                     c, heads, hidden, chp, out_pad)

    # Fold the two propagation hops once when that is cheaper than doing them
    # per layer: n^3 < layer_num * n^2 * chp  <=>  n < layer_num * chp.
    if n <= cfg["layer_num"] * chp:
        a_op = (a_norm @ a_norm).astype(jnp.bfloat16)   # f32 matmul, one bf16 cast
        double_hop = False
    else:
        a_op = a_norm.astype(jnp.bfloat16)
        double_hop = True

    kern = functools.partial(
        fused_kernel, n_layer=cfg["layer_num"],
        feat_weight=float(cfg["feat_weight"]),
        double_hop=double_hop, compute_dtype=compute_dtype)

    # ---- cost estimate / VMEM budget -----------------------------------------
    hops = 2 if double_hop else 1
    flops = (2 * n * hidden * chp                           # input linear
             + 2 * n * n * chp * hops * cfg["layer_num"]    # propagation
             + n * chp                                      # attn multiply
             + 2 * n * chp * out_pad)                       # head matmul
    t_bytes = jnp.dtype(compute_dtype).itemsize
    bytes_accessed = (2 * a_op.size                                   # bf16 A
                      + t_bytes * tracks0.size
                      + 4 * (attn_slab.size + x0.size + w_in_rep.size
                             + b_in_rep.size + w_head.size
                             + n_col_blocks * n * out_pad))
    cost = pl.CostEstimate(flops=int(flops), transcendentals=0,
                           bytes_accessed=int(bytes_accessed))

    resident = (2 * 2 * a_op.size                            # bf16 A, buffered
                + 2 * n * blk * (t_bytes + 4)                # tracks + attn blocks
                + 2 * 4 * (hidden * blk + blk + blk * out_pad + n * out_pad)
                + 8 * n * blk * 4)                           # live f32 intermediates
    ceiling = (56 << 20) if "v7" in kind else (100 << 20)
    vmem_limit = int(min(ceiling, max(16 << 20, 2 * resident)))

    partials = pl.pallas_call(
        kern,
        out_shape=jax.ShapeDtypeStruct((n_col_blocks, n, out_pad), jnp.float32),
        grid=(n_col_blocks,),
        in_specs=[
            pl.BlockSpec((n, blk), lambda j: (0, j)),          # packed tracks
            pl.BlockSpec((n, blk), lambda j: (0, j)),          # attn slab
            pl.BlockSpec((n, hidden), lambda j: (0, 0)),       # x0 (resident)
            pl.BlockSpec((n, n), lambda j: (0, 0)),            # A / A@A (resident)
            pl.BlockSpec((hidden, blk), lambda j: (0, j)),     # replicated W_in
            pl.BlockSpec((1, blk), lambda j: (0, j)),          # replicated b_in
            pl.BlockSpec((blk, out_pad), lambda j: (j, 0)),    # folded head matrix
        ],
        out_specs=pl.BlockSpec((1, n, out_pad), lambda j: (j, 0, 0)),
        compiler_params=pltpu.CompilerParams(
            dimension_semantics=("parallel",),
            vmem_limit_bytes=vmem_limit),
        cost_estimate=cost,
    )(tracks0, attn_slab, x0, a_op, w_in_rep, b_in_rep, w_head)

    # cheap trailing op: sum per-column-block partials, slice lane-dense slab,
    # add the (single) extractor bias.
    return jnp.sum(partials, axis=0)[:, :out_dim] + b_head


def tree_track_reference(params, cfg, track_h, attn, x0, a_norm):
    """Pure-JAX reference mirroring the PyTorch forward (eval mode)."""
    c, heads, hidden = cfg["num_classes"], cfg["n_heads"], cfg["hidden"]
    H = hidden * heads
    n = x0.shape[0]
    init = jnp.maximum(x0 @ params["w_in"] + params["b_in"], 0.0)
    init_rep = jnp.tile(init, (1, c))
    t = jnp.transpose(track_h, (1, 0, 2)).reshape(n, c * H)
    fw = cfg["feat_weight"]
    for _ in range(cfg["layer_num"]):
        t = fw * (a_norm @ (a_norm @ t)) + (1.0 - fw) * init_rep
    tr = t.reshape(n, c, H).transpose(1, 0, 2)          # 'b (c h) -> c b h'
    new_emb = jnp.sum(attn.T[:, :, None] * tr, axis=0)  # (n, H)
    if heads != 1:
        ne = new_emb.reshape(n, heads, hidden).transpose(0, 2, 1)  # b h e
        new_emb = (ne @ params["w_ex"].T[:, :1]).squeeze(-1) + params["b_ex"][0, 0]
    return new_emb


# ----------------------------------- main -----------------------------------

if __name__ == "__main__":
    cfg = dict(num_classes=3, layer_num=2, n_heads=2, hidden=32,
               dr=0.1, feat_weight=0.5)
    n_nodes = 8
    H = cfg["hidden"] * cfg["n_heads"]

    key = jax.random.PRNGKey(0)
    kp, kt, ka, kx = jax.random.split(key, 4)
    params = init_params(kp, cfg["hidden"], cfg["n_heads"])

    # inputs: track_h (c, n, hidden*n_heads), attn (n, c), data.x (n, hidden)
    track_h = jax.random.normal(kt, (cfg["num_classes"], n_nodes, H), jnp.float32)
    attn = jax.nn.softmax(jax.random.normal(ka, (n_nodes, cfg["num_classes"]),
                                            jnp.float32), axis=-1)
    x0 = jax.random.normal(kx, (n_nodes, cfg["hidden"]), jnp.float32)

    # symmetric ring graph as data.adj_t; gcn_norm precomputed densely (glue)
    src = jnp.arange(n_nodes)
    dst = (src + 1) % n_nodes
    edge_index = jnp.stack([jnp.concatenate([src, dst]),
                            jnp.concatenate([dst, src])])
    a_norm = gcn_norm_dense(edge_index, n_nodes)

    out = tree_track_forward(params, cfg, track_h, attn, x0, a_norm)
    out = jax.block_until_ready(out)

    ref = tree_track_reference(params, cfg, track_h, attn, x0, a_norm)
    assert out.shape == (n_nodes, cfg["hidden"])
    # bf16 MXU operands with f32/bf16 accumulation => 2e-2 tolerance
    assert jnp.allclose(out, ref, rtol=2e-2, atol=2e-2)

    print("KERNEL_OK")
</pallas_src>

<mosaic_0001>
module attributes {stable_mosaic.version = 11 : i64} {
  func.func @fused_kernel(%arg0: i32, %arg1: memref<8x256xf32, #tpu.memory_space<vmem>>, %arg2: memref<8x256xf32, #tpu.memory_space<vmem>>, %arg3: memref<8x32xf32, #tpu.memory_space<vmem>>, %arg4: memref<8x8xbf16, #tpu.memory_space<vmem>>, %arg5: memref<32x256xf32, #tpu.memory_space<vmem>>, %arg6: memref<1x256xf32, #tpu.memory_space<vmem>>, %arg7: memref<256x128xf32, #tpu.memory_space<vmem>>, %arg8: memref<1x8x128xf32, #tpu.memory_space<vmem>>) attributes {dimension_semantics = [#tpu.dimension_semantics<parallel>], iteration_bounds = array<i64: 1>, scalar_prefetch = 0 : i64, scratch_operands = 0 : i64, tpu.core_type = #tpu.core_type<tc>, window_params = [{transform_indices = @transform_0, window_bounds = array<i64: 8, 256>}, {transform_indices = @transform_1, window_bounds = array<i64: 8, 256>}, {pipeline_mode = #tpu.pipeline_mode<synchronous>, transform_indices = @transform_2, window_bounds = array<i64: 8, 32>}, {pipeline_mode = #tpu.pipeline_mode<synchronous>, transform_indices = @transform_3, window_bounds = array<i64: 8, 8>}, {transform_indices = @transform_4, window_bounds = array<i64: 32, 256>}, {transform_indices = @transform_5, window_bounds = array<i64: 1, 256>}, {transform_indices = @transform_6, window_bounds = array<i64: 256, 128>}, {transform_indices = @transform_7, window_bounds = array<i64: 1, 8, 128>}]} {
    %c0 = arith.constant 0 : index
    %c0_0 = arith.constant 0 : index
    %0 = vector.load %arg3[%c0, %c0_0] : memref<8x32xf32, #tpu.memory_space<vmem>>, vector<8x32xf32>
    %c0_1 = arith.constant 0 : index
    %c0_2 = arith.constant 0 : index
    %1 = vector.load %arg5[%c0_1, %c0_2] : memref<32x256xf32, #tpu.memory_space<vmem>>, vector<32x256xf32>
    %cst = arith.constant dense<0.000000e+00> : vector<8x256xf32>
    %2 = tpu.matmul %0, %1, %cst {dimension_numbers = #tpu.dot_dimension_numbers<[1], [0], [0], [1], [0, 0, 1, 1], [], []>} : vector<8x32xf32>, vector<32x256xf32>, vector<8x256xf32> -> vector<8x256xf32>
    %c0_3 = arith.constant 0 : index
    %c0_4 = arith.constant 0 : index
    %3 = vector.load %arg6[%c0_3, %c0_4] : memref<1x256xf32, #tpu.memory_space<vmem>>, vector<1x256xf32>
    %4 = vector.broadcast %3 : vector<1x256xf32> to vector<8x256xf32>
    %5 = arith.addf %2, %4 : vector<8x256xf32>
    %cst_5 = arith.constant 0.000000e+00 : f32
    %6 = vector.broadcast %cst_5 : f32 to vector<8x256xf32>
    %7 = arith.maximumf %5, %6 : vector<8x256xf32>
    %cst_6 = arith.constant 5.000000e-01 : f32
    %8 = vector.broadcast %cst_6 : f32 to vector<8x256xf32>
    %9 = arith.mulf %8, %7 : vector<8x256xf32>
    %c0_7 = arith.constant 0 : index
    %c0_8 = arith.constant 0 : index
    %10 = vector.load %arg4[%c0_7, %c0_8] : memref<8x8xbf16, #tpu.memory_space<vmem>>, vector<8x8xbf16>
    %c0_9 = arith.constant 0 : index
    %c0_10 = arith.constant 0 : index
    %11 = vector.load %arg1[%c0_9, %c0_10] : memref<8x256xf32, #tpu.memory_space<vmem>>, vector<8x256xf32>
    %12 = arith.truncf %11 : vector<8x256xf32> to vector<8x256xbf16>
    %cst_11 = arith.constant dense<0.000000e+00> : vector<8x256xf32>
    %13 = tpu.matmul %10, %12, %cst_11 {dimension_numbers = #tpu.dot_dimension_numbers<[1], [0], [0], [1], [0, 0, 1, 1], [], []>} : vector<8x8xbf16>, vector<8x256xbf16>, vector<8x256xf32> -> vector<8x256xf32>
    %cst_12 = arith.constant 5.000000e-01 : f32
    %14 = vector.broadcast %cst_12 : f32 to vector<8x256xf32>
    %15 = arith.mulf %14, %13 : vector<8x256xf32>
    %16 = arith.addf %15, %9 : vector<8x256xf32>
    %17 = arith.truncf %16 : vector<8x256xf32> to vector<8x256xbf16>
    %cst_13 = arith.constant dense<0.000000e+00> : vector<8x256xf32>
    %18 = tpu.matmul %10, %17, %cst_13 {dimension_numbers = #tpu.dot_dimension_numbers<[1], [0], [0], [1], [0, 0, 1, 1], [], []>} : vector<8x8xbf16>, vector<8x256xbf16>, vector<8x256xf32> -> vector<8x256xf32>
    %cst_14 = arith.constant 5.000000e-01 : f32
    %19 = vector.broadcast %cst_14 : f32 to vector<8x256xf32>
    %20 = arith.mulf %19, %18 : vector<8x256xf32>
    %21 = arith.addf %20, %9 : vector<8x256xf32>
    %c0_15 = arith.constant 0 : index
    %c0_16 = arith.constant 0 : index
    %22 = vector.load %arg2[%c0_15, %c0_16] : memref<8x256xf32, #tpu.memory_space<vmem>>, vector<8x256xf32>
    %23 = arith.mulf %22, %21 : vector<8x256xf32>
    %c0_17 = arith.constant 0 : index
    %c0_18 = arith.constant 0 : index
    %24 = vector.load %arg7[%c0_17, %c0_18] : memref<256x128xf32, #tpu.memory_space<vmem>>, vector<256x128xf32>
    %cst_19 = arith.constant dense<0.000000e+00> : vector<8x128xf32>
    %25 = tpu.matmul %23, %24, %cst_19 {dimension_numbers = #tpu.dot_dimension_numbers<[1], [0], [0], [1], [0, 0, 1, 1], [], []>} : vector<8x256xf32>, vector<256x128xf32>, vector<8x128xf32> -> vector<8x128xf32>
    %c0_20 = arith.constant 0 : index
    %c0_21 = arith.constant 0 : index
    %c0_22 = arith.constant 0 : index
    %26 = vector.load %arg8[%c0_20, %c0_21, %c0_22] : memref<1x8x128xf32, #tpu.memory_space<vmem>>, vector<1x8x128xf32>
    %27 = vector.shape_cast %26 : vector<1x8x128xf32> to vector<8x128xf32>
    %28 = vector.shape_cast %25 : vector<8x128xf32> to vector<1x8x128xf32>
    tpu.vector_store %arg8[%c0_20, %c0_21, %c0_22], %28 {strides = array<i32>} : memref<1x8x128xf32, #tpu.memory_space<vmem>>, vector<1x8x128xf32>,
    return
  }
  func.func @transform_0(%arg0: i32) -> (i32, i32) {
    %c0_i32 = arith.constant 0 : i32
    %c0_i32_0 = arith.constant 0 : i32
    return %c0_i32, %arg0 : i32, i32
  }
  func.func @transform_1(%arg0: i32) -> (i32, i32) {
    %c0_i32 = arith.constant 0 : i32
    %c0_i32_0 = arith.constant 0 : i32
    return %c0_i32, %arg0 : i32, i32
  }
  func.func @transform_2(%arg0: i32) -> (i32, i32) {
    %c0_i32 = arith.constant 0 : i32
    %c0_i32_0 = arith.constant 0 : i32
    %c0_i32_1 = arith.constant 0 : i32
    return %c0_i32, %c0_i32_0 : i32, i32
  }
  func.func @transform_3(%arg0: i32) -> (i32, i32) {
    %c0_i32 = arith.constant 0 : i32
    %c0_i32_0 = arith.constant 0 : i32
    %c0_i32_1 = arith.constant 0 : i32
    return %c0_i32, %c0_i32_0 : i32, i32
  }
  func.func @transform_4(%arg0: i32) -> (i32, i32) {
    %c0_i32 = arith.constant 0 : i32
    %c0_i32_0 = arith.constant 0 : i32
    return %c0_i32, %arg0 : i32, i32
  }
  func.func @transform_5(%arg0: i32) -> (i32, i32) {
    %c0_i32 = arith.constant 0 : i32
    %c0_i32_0 = arith.constant 0 : i32
    return %c0_i32, %arg0 : i32, i32
  }
  func.func @transform_6(%arg0: i32) -> (i32, i32) {
    %c0_i32 = arith.constant 0 : i32
    %c0_i32_0 = arith.constant 0 : i32
    return %arg0, %c0_i32 : i32, i32
  }
  func.func @transform_7(%arg0: i32) -> (i32, i32, i32) {
    %c0_i32 = arith.constant 0 : i32
    %c0_i32_0 = arith.constant 0 : i32
    %c0_i32_1 = arith.constant 0 : i32
    return %arg0, %c0_i32, %c0_i32_0 : i32, i32, i32
  }
}

</mosaic_0001>

<llo_original>
// kernel: tpu_custom_call.1
$region0: #{tpu_custom_call.1}
  #allocation0 [shape = 'u32[]', space=smem, size = 0x4, offset = 0x4, fixed_abs, tag = 'smem constant byte address 0x4 - core index']
  #allocation1 [shape = 'u32[144,128]{1,0:T(1,128)}', space=vmem, size = 0x12000, scoped, tag = 'internal scratch']
  %s0 = inlined_call_operand.hbm [shape: f32[8,256], index: 0, kind: input, shape index: {}]
  %s1 = inlined_call_operand.hbm [shape: f32[8,256], index: 1, kind: input, shape index: {}]
  %s2 = inlined_call_operand.hbm [shape: f32[8,32], index: 2, kind: input, shape index: {}]
  %s3 = inlined_call_operand.vmem [shape: bf16[8,8], index: 3, kind: input, shape index: {}]
  %s4 = inlined_call_operand.hbm [shape: f32[32,256], index: 4, kind: input, shape index: {}]
  %s5 = inlined_call_operand.vmem [shape: f32[1,256], index: 5, kind: input, shape index: {}]
  %s6 = inlined_call_operand.hbm [shape: f32[256,128], index: 6, kind: input, shape index: {}]
  %s7 = inlined_call_operand.hbm [shape: f32[1,8,128], index: 7, kind: output, shape index: {}]
  %s8 = sld [smem:[#allocation0]]
  $region58: #{tpu_custom_call.1} parent=0
    _
  %s10 = ssub.s32 1, %s8
  %s11 = scalar_select 0, %s10, %s8
  $region1: #{tpu_custom_call.1} parent=0
    #allocation2 [shape = 'u8[8192]{0}', space=vmem, size = 0x2000, scoped, tag = 'input window, operand 0, single buffered']
    #allocation3 [shape = 's32[1]{0}', space=sflag, size = 0x4, scoped, tag = 'scoped memory for tpu_custom_call.1']
    #allocation4 [shape = 's32[1]{0}', space=sflag, size = 0x4, scoped, tag = 'scoped memory for tpu_custom_call.1']
    #allocation5 [shape = 'u8[8192]{0}', space=vmem, size = 0x2000, scoped, tag = 'input window, operand 1, single buffered']
    #allocation6 [shape = 's32[1]{0}', space=sflag, size = 0x4, scoped, tag = 'scoped memory for tpu_custom_call.1']
    #allocation7 [shape = 'u8[4096]{0}', space=vmem, size = 0x1000, scoped, tag = 'input window, operand 2, single buffered']
    #allocation8 [shape = 'u8[32768]{0}', space=vmem, size = 0x8000, scoped, tag = 'input window, operand 4, single buffered']
    #allocation9 [shape = 's32[1]{0}', space=sflag, size = 0x4, scoped, tag = 'scoped memory for tpu_custom_call.1']
    #allocation10 [shape = 'u8[131072]{0}', space=vmem, size = 0x20000, scoped, tag = 'input window, operand 6, single buffered']
    #allocation11 [shape = 'u8[4096]{0}', space=vmem, size = 0x1000, scoped, tag = 'output window, operand 0, single buffered']
    %12 = vsyncpa [#allocation3], 0
    %13 = vsyncpa [#allocation6], 0
    %14 = vsyncpa [#allocation9], 0
    %15 = vsyncpa [#allocation4], 0
    // Predicated region
    $region2: #{tpu_custom_call.1} parent=1 // pred_check
      _
    $region3: #{tpu_custom_call.1} parent=1 // pred_check_branch
      %17 = sbr.rel (0) target = $region5
    $region4: #{tpu_custom_call.1} parent=1 // pred_region
      %s19 = ssub.s32 256, 256
      %20 = vsyncadd [#allocation3], %s19
      %s22 = sshll.u32 [#allocation2], 4
      %s23 = int_to_ptr.vmem [resolvable:$true] %s22
      %25 = dma.hbm_to_vmem [thread:$0]  %s0, 256, %s23, [#allocation3]
    $region5: #{tpu_custom_call.1} parent=1 // pred_fallthru
      _
    // Predicated region
    $region6: #{tpu_custom_call.1} parent=1 // pred_check
      _
    $region7: #{tpu_custom_call.1} parent=1 // pred_check_branch
      %27 = sbr.rel (0) target = $region9
    $region8: #{tpu_custom_call.1} parent=1 // pred_region
      %s29 = ssub.s32 256, 256
      %30 = vsyncadd [#allocation6], %s29
      %s32 = sshll.u32 [#allocation5], 4
      %s33 = int_to_ptr.vmem [resolvable:$true] %s32
      %35 = dma.hbm_to_vmem [thread:$0]  %s1, 256, %s33, [#allocation6]
    $region9: #{tpu_custom_call.1} parent=1 // pred_fallthru
      _
    // Predicated region
    $region10: #{tpu_custom_call.1} parent=1 // pred_check
      _
    $region11: #{tpu_custom_call.1} parent=1 // pred_check_branch
      %37 = sbr.rel (0) target = $region13
    $region12: #{tpu_custom_call.1} parent=1 // pred_region
      %s39 = ssub.s32 128, 128
      %40 = vsyncadd [#allocation6], %s39
      %s42 = sshll.u32 [#allocation7], 4
      %s43 = int_to_ptr.vmem [resolvable:$true] %s42
      %45 = dma.hbm_to_vmem [thread:$0]  %s2, 128, %s43, [#allocation6]
    $region13: #{tpu_custom_call.1} parent=1 // pred_fallthru
      _
    // Predicated region
    $region14: #{tpu_custom_call.1} parent=1 // pred_check
      _
    $region15: #{tpu_custom_call.1} parent=1 // pred_check_branch
      %47 = sbr.rel (0) target = $region17
    $region16: #{tpu_custom_call.1} parent=1 // pred_region
      _
    $region17: #{tpu_custom_call.1} parent=1 // pred_fallthru
      _
    // Predicated region
    $region18: #{tpu_custom_call.1} parent=1 // pred_check
      _
    $region19: #{tpu_custom_call.1} parent=1 // pred_check_branch
      %49 = sbr.rel (0) target = $region21
    $region20: #{tpu_custom_call.1} parent=1 // pred_region
      %s51 = ssub.s32 1024, 1024
      %52 = vsyncadd [#allocation9], %s51
      %s53 = sshll.u32 [#allocation8], 4
      %s54 = int_to_ptr.vmem [resolvable:$true] %s53
      %59 = dma.hbm_to_vmem [thread:$0]  %s4, 1024, %s54, [#allocation9], 256, 256, 16
    $region21: #{tpu_custom_call.1} parent=1 // pred_fallthru
      _
    // Predicated region
    $region22: #{tpu_custom_call.1} parent=1 // pred_check
      _
    $region23: #{tpu_custom_call.1} parent=1 // pred_check_branch
      %61 = sbr.rel (0) target = $region25
    $region24: #{tpu_custom_call.1} parent=1 // pred_region
      _
    $region25: #{tpu_custom_call.1} parent=1 // pred_fallthru
      _
    // Predicated region
    $region26: #{tpu_custom_call.1} parent=1 // pred_check
      _
    $region27: #{tpu_custom_call.1} parent=1 // pred_check_branch
      %63 = sbr.rel (0) target = $region29
    $region28: #{tpu_custom_call.1} parent=1 // pred_region
      %s65 = ssub.s32 4096, 4096
      %66 = vsyncadd [#allocation9], %s65
      %s67 = sshll.u32 [#allocation10], 4
      %s68 = int_to_ptr.vmem [resolvable:$true] %s67
      %73 = dma.hbm_to_vmem [thread:$0]  %s6, 4096, %s68, [#allocation9], 128, 128, 8
    $region29: #{tpu_custom_call.1} parent=1 // pred_fallthru
      _
    // Predicated region
    $region30: #{tpu_custom_call.1} parent=1 // pred_check
      _
    $region31: #{tpu_custom_call.1} parent=1 // pred_check_branch
      %75 = sbr.rel (0) target = $region33
    $region32: #{tpu_custom_call.1} parent=1 // pred_region
      %76 = dma.done [#allocation3], 256
    $region33: #{tpu_custom_call.1} parent=1 // pred_fallthru
      _
    // Predicated region
    $region34: #{tpu_custom_call.1} parent=1 // pred_check
      _
    $region35: #{tpu_custom_call.1} parent=1 // pred_check_branch
      %78 = sbr.rel (0) target = $region37
    $region36: #{tpu_custom_call.1} parent=1 // pred_region
      %79 = dma.done [#allocation6], 256
    $region37: #{tpu_custom_call.1} parent=1 // pred_fallthru
      _
    // Predicated region
    $region38: #{tpu_custom_call.1} parent=1 // pred_check
      _
    $region39: #{tpu_custom_call.1} parent=1 // pred_check_branch
      %81 = sbr.rel (0) target = $region41
    $region40: #{tpu_custom_call.1} parent=1 // pred_region
      %82 = dma.done [#allocation6], 128
    $region41: #{tpu_custom_call.1} parent=1 // pred_fallthru
      _
    // Predicated region
    $region42: #{tpu_custom_call.1} parent=1 // pred_check
      _
    $region43: #{tpu_custom_call.1} parent=1 // pred_check_branch
      %84 = sbr.rel (0) target = $region45
    $region44: #{tpu_custom_call.1} parent=1 // pred_region
      %85 = dma.done [#allocation9], 1024
    $region45: #{tpu_custom_call.1} parent=1 // pred_fallthru
      _
    // Predicated region
    $region46: #{tpu_custom_call.1} parent=1 // pred_check
      _
    $region47: #{tpu_custom_call.1} parent=1 // pred_check_branch
      %87 = sbr.rel (0) target = $region49
    $region48: #{tpu_custom_call.1} parent=1 // pred_region
      %88 = dma.done [#allocation9], 4096
    $region49: #{tpu_custom_call.1} parent=1 // pred_fallthru
      _
    %v90 = vld [vmem:[#allocation7] sm:$0xff]
    %v91 = vld [vmem:[#allocation8] sm:$0xff]
    %v92 = vld [vmem:[#allocation8 + $0x8] sm:$0xff]
    %v93 = vld [vmem:[#allocation8 + $0x10] sm:$0xff]
    %v94 = vld [vmem:[#allocation8 + $0x18] sm:$0xff]
    %v95 = vld [vmem:[#allocation8 + $0x20] sm:$0xff]
    %v96 = vld [vmem:[#allocation8 + $0x28] sm:$0xff]
    %v97 = vld [vmem:[#allocation8 + $0x30] sm:$0xff]
    %v98 = vld [vmem:[#allocation8 + $0x38] sm:$0xff]
    %v99 = vld [vmem:[%s5] sm:$0x3]
    %v101 = vlaneseq
    %v102 = vshrl.u32 %v101, 7
    %v103 = vsub.s32 0, %v102
    %v104 = vrot.slane %v99, %v103
    %v105 = vlaneseq
    %v106 = vshrl.u32 %v105, 7
    %v107 = vsub.s32 1, %v106
    %v108 = vrot.slane %v99, %v107
    %vm111 = vcmask 261120
    %v113 = vsel %vm111, %v90, 0
    %115 = vmatprep.subr.mxu0 0.0
    %116 = vmatpush1.msra.mxu0 0.0
    %117 = vmatprep.subr.mxu0 0.0
    %118 = vmatpush1.msra.mxu0 0.0
    %119 = vmatprep.subr.mxu0 0.0
    %120 = vmatpush1.msra.mxu0 0.0
    %121 = vmatprep.subr.mxu0 0.0
    %122 = vmatpush1.msra.mxu0 0.0
    %123 = vmatprep.subr.mxu0 0.0
    %124 = vmatpush1.msra.mxu0 0.0
    %125 = vmatprep.subr.mxu0 0.0
    %126 = vmatpush1.msra.mxu0 0.0
    %127 = vmatprep.subr.mxu0 0.0
    %128 = vmatpush1.msra.mxu0 0.0
    %129 = vmatprep.subr.mxu0 0.0
    %130 = vmatpush1.msra.mxu0 0.0
    %131 = vmatprep.subr.mxu0 0.0
    %132 = vmatpush1.msra.mxu0 0.0
    %133 = vmatprep.subr.mxu0 0.0
    %134 = vmatpush1.msra.mxu0 0.0
    %135 = vmatprep.subr.mxu0 0.0
    %136 = vmatpush1.msra.mxu0 0.0
    %137 = vmatprep.subr.mxu0 0.0
    %138 = vmatpush1.msra.mxu0 0.0
    %139 = vmatprep.subr.mxu0 %v98
    %140 = vmatpush1.msra.mxu0 %v97
    %141 = vmatprep.subr.mxu0 %v96
    %142 = vmatpush1.msra.mxu0 %v95
    %143 = vmatprep.subr.mxu0 %v94
    %144 = vmatpush1.msra.mxu0 %v93
    %145 = vmatprep.subr.mxu0 %v92
    %146 = vmatpush1.msra.mxu0 %v91
    %147 = vmatprep.subr.mxu0 0.0
    %148 = vmatpush2.msra.mxu0 0.0
    %149 = vmatprep.subr.mxu0 0.0
    %150 = vmatpush2.msra.mxu0 0.0
    %151 = vmatprep.subr.mxu0 0.0
    %152 = vmatpush2.msra.mxu0 0.0
    %153 = vmatprep.subr.mxu0 0.0
    %154 = vmatpush2.msra.mxu0 0.0
    %155 = vmatprep.subr.mxu0 0.0
    %156 = vmatpush2.msra.mxu0 0.0
    %157 = vmatprep.subr.mxu0 0.0
    %158 = vmatpush2.msra.mxu0 0.0
    %159 = vmatprep.subr.mxu0 0.0
    %160 = vmatpush2.msra.mxu0 0.0
    %161 = vmatprep.subr.mxu0 0.0
    %162 = vmatpush2.msra.mxu0 0.0
    %163 = vmatprep.subr.mxu0 0.0
    %164 = vmatpush2.msra.mxu0 0.0
    %165 = vmatprep.subr.mxu0 0.0
    %166 = vmatpush2.msra.mxu0 0.0
    %167 = vmatprep.subr.mxu0 0.0
    %168 = vmatpush2.msra.mxu0 0.0
    %169 = vmatprep.subr.mxu0 0.0
    %170 = vmatpush2.msra.mxu0 0.0
    %171 = vmatprep.subr.mxu0 0.0
    %172 = vmatpush2.msra.mxu0 0.0
    %173 = vmatprep.subr.mxu0 0.0
    %174 = vmatpush2.msra.mxu0 0.0
    %175 = vmatprep.subr.mxu0 0.0
    %176 = vmatpush2.msra.mxu0 0.0
    %177 = vmatprep.subr.mxu0 0.0
    %178 = vmatpush2.msra.mxu0 0.0
    %179 = vmatprep.mubr.f32.mxu0 0.0
    %180 = vmatmul.mubr.f32.gmra.mxu0 %v113
    %v181 = vpop.f32.mrf.mxu0
    %v182 = vadd.f32 %v104, %v181
    %v183 = vpop.f32.mrf.mxu0
    %v184 = vadd.f32 %v108, %v183
    %185 = vdwg.mxu0
    %v186 = vmax.f32 %v182, 0.0
    %v187 = vmax.f32 %v184, 0.0
    %v188 = vmul.f32 %v186, 0.5
    %v189 = vmul.f32 %v187, 0.5
    %v190 = vld [vmem:[%s3] sm:$0xf]
    %v191 = vld [vmem:[#allocation2] sm:$0xff]
    %v192 = vld [vmem:[#allocation2 + $0x8] sm:$0xff]
    %v193 = vpack.c.bf16 %v191, %v191
    %v194 = vpack.c.bf16 %v192, %v192
    %vm195 = vcmask 64512
    %v197 = vsel %vm195, %v190, 0
    %vm199 = vcmask 1043456
    %v201 = vsel %vm199, %v193, 0
    %v204 = vsel %vm199, %v194, 0
    %206 = vmatprep.subr.bf16.mxu0 0
    %207 = vmatpush1.bf16.msra.mxu0 0
    %208 = vmatprep.subr.bf16.mxu0 0
    %209 = vmatpush1.bf16.msra.mxu0 0
    %210 = vmatprep.subr.bf16.mxu0 0
    %211 = vmatpush1.bf16.msra.mxu0 0
    %212 = vmatprep.subr.bf16.mxu0 0
    %213 = vmatpush1.bf16.msra.mxu0 0
    %214 = vmatprep.subr.bf16.mxu0 0
    %215 = vmatpush1.bf16.msra.mxu0 0
    %216 = vmatprep.subr.bf16.mxu0 0
    %217 = vmatpush1.bf16.msra.mxu0 0
    %218 = vmatprep.subr.bf16.mxu0 0
    %219 = vmatpush1.bf16.msra.mxu0 0
    %220 = vmatprep.subr.bf16.mxu0 %v204
    %221 = vmatpush1.bf16.msra.mxu0 %v201
    %222 = vmatprep.subr.bf16.mxu0 0
    %223 = vmatpush2.bf16.msra.mxu0 0
    %224 = vmatprep.subr.bf16.mxu0 0
    %225 = vmatpush2.bf16.msra.mxu0 0
    %226 = vmatprep.subr.bf16.mxu0 0
    %227 = vmatpush2.bf16.msra.mxu0 0
    %228 = vmatprep.subr.bf16.mxu0 0
    %229 = vmatpush2.bf16.msra.mxu0 0
    %230 = vmatprep.subr.bf16.mxu0 0
    %231 = vmatpush2.bf16.msra.mxu0 0
    %232 = vmatprep.subr.bf16.mxu0 0
    %233 = vmatpush2.bf16.msra.mxu0 0
    %234 = vmatprep.subr.bf16.mxu0 0
    %235 = vmatpush2.bf16.msra.mxu0 0
    %236 = vmatprep.subr.bf16.mxu0 0
    %237 = vmatpush2.bf16.msra.mxu0 0
    %238 = vmatprep.mubr.bf16.mxu0 0
    %239 = vmatmul.mubr.bf16.gmra.mxu0 %v197
    %v240 = vpop.f32.mrf.mxu0
    %v241 = vadd.f32 0.0, %v240
    %v242 = vpop.f32.mrf.mxu0
    %v243 = vadd.f32 0.0, %v242
    %v244 = vpop.f32.mrf.mxu0
    %v245 = vpop.f32.mrf.mxu0
    %246 = vdwg.mxu0
    %v247 = vmul.f32 %v241, 0.5
    %v248 = vmul.f32 %v243, 0.5
    %v249 = vadd.f32 %v247, %v188
    %v250 = vadd.f32 %v248, %v189
    %v251 = vpack.c.bf16 %v249, %v249
    %v252 = vpack.c.bf16 %v250, %v250
    %v254 = vsel %vm199, %v251, 0
    %v257 = vsel %vm199, %v252, 0
    %259 = vmatprep.subr.bf16.mxu0 0
    %260 = vmatpush1.bf16.msra.mxu0 0
    %261 = vmatprep.subr.bf16.mxu0 0
    %262 = vmatpush1.bf16.msra.mxu0 0
    %263 = vmatprep.subr.bf16.mxu0 0
    %264 = vmatpush1.bf16.msra.mxu0 0
    %265 = vmatprep.subr.bf16.mxu0 0
    %266 = vmatpush1.bf16.msra.mxu0 0
    %267 = vmatprep.subr.bf16.mxu0 0
    %268 = vmatpush1.bf16.msra.mxu0 0
    %269 = vmatprep.subr.bf16.mxu0 0
    %270 = vmatpush1.bf16.msra.mxu0 0
    %271 = vmatprep.subr.bf16.mxu0 0
    %272 = vmatpush1.bf16.msra.mxu0 0
    %273 = vmatprep.subr.bf16.mxu0 %v257
    %274 = vmatpush1.bf16.msra.mxu0 %v254
    %275 = vmatprep.subr.bf16.mxu0 0
    %276 = vmatpush2.bf16.msra.mxu0 0
    %277 = vmatprep.subr.bf16.mxu0 0
    %278 = vmatpush2.bf16.msra.mxu0 0
    %279 = vmatprep.subr.bf16.mxu0 0
    %280 = vmatpush2.bf16.msra.mxu0 0
    %281 = vmatprep.subr.bf16.mxu0 0
    %282 = vmatpush2.bf16.msra.mxu0 0
    %283 = vmatprep.subr.bf16.mxu0 0
    %284 = vmatpush2.bf16.msra.mxu0 0
    %285 = vmatprep.subr.bf16.mxu0 0
    %286 = vmatpush2.bf16.msra.mxu0 0
    %287 = vmatprep.subr.bf16.mxu0 0
    %288 = vmatpush2.bf16.msra.mxu0 0
    %289 = vmatprep.subr.bf16.mxu0 0
    %290 = vmatpush2.bf16.msra.mxu0 0
    %291 = vmatprep.mubr.bf16.mxu0 0
    %292 = vmatmul.mubr.bf16.gmra.mxu0 %v197
    %v293 = vpop.f32.mrf.mxu0
    %v294 = vadd.f32 0.0, %v293
    %v295 = vpop.f32.mrf.mxu0
    %v296 = vadd.f32 0.0, %v295
    %v297 = vpop.f32.mrf.mxu0
    %v298 = vpop.f32.mrf.mxu0
    %299 = vdwg.mxu0
    %v300 = vmul.f32 %v294, 0.5
    %v301 = vmul.f32 %v296, 0.5
    %v302 = vadd.f32 %v300, %v188
    %v303 = vadd.f32 %v301, %v189
    %v304 = vld [vmem:[#allocation5] sm:$0xff]
    %v305 = vld [vmem:[#allocation5 + $0x8] sm:$0xff]
    %v306 = vmul.f32 %v304, %v302
    %v307 = vmul.f32 %v305, %v303
    %v308 = vld [vmem:[#allocation10] sm:$0xff]
    %v309 = vld [vmem:[#allocation10 + $0x8] sm:$0xff]
    %v310 = vld [vmem:[#allocation10 + $0x10] sm:$0xff]
    %v311 = vld [vmem:[#allocation10 + $0x18] sm:$0xff]
    %v312 = vld [vmem:[#allocation10 + $0x20] sm:$0xff]
    %v313 = vld [vmem:[#allocation10 + $0x28] sm:$0xff]
    %v314 = vld [vmem:[#allocation10 + $0x30] sm:$0xff]
    %v315 = vld [vmem:[#allocation10 + $0x38] sm:$0xff]
    %v316 = vld [vmem:[#allocation10 + $0x40] sm:$0xff]
    %v317 = vld [vmem:[#allocation10 + $0x48] sm:$0xff]
    %v318 = vld [vmem:[#allocation10 + $0x50] sm:$0xff]
    %v319 = vld [vmem:[#allocation10 + $0x58] sm:$0xff]
    %v320 = vld [vmem:[#allocation10 + $0x60] sm:$0xff]
    %v321 = vld [vmem:[#allocation10 + $0x68] sm:$0xff]
    %v322 = vld [vmem:[#allocation10 + $0x70] sm:$0xff]
    %v323 = vld [vmem:[#allocation10 + $0x78] sm:$0xff]
    %v324 = vld [vmem:[#allocation10 + $0x80] sm:$0xff]
    %v325 = vld [vmem:[#allocation10 + $0x88] sm:$0xff]
    %v326 = vld [vmem:[#allocation10 + $0x90] sm:$0xff]
    %v327 = vld [vmem:[#allocation10 + $0x98] sm:$0xff]
    %v328 = vld [vmem:[#allocation10 + $0xa0] sm:$0xff]
    %v329 = vld [vmem:[#allocation10 + $0xa8] sm:$0xff]
    %v330 = vld [vmem:[#allocation10 + $0xb0] sm:$0xff]
    %v331 = vld [vmem:[#allocation10 + $0xb8] sm:$0xff]
    %v332 = vld [vmem:[#allocation10 + $0xc0] sm:$0xff]
    %v333 = vld [vmem:[#allocation10 + $0xc8] sm:$0xff]
    %v334 = vld [vmem:[#allocation10 + $0xd0] sm:$0xff]
    %v335 = vld [vmem:[#allocation10 + $0xd8] sm:$0xff]
    %v336 = vld [vmem:[#allocation10 + $0xe0] sm:$0xff]
    %v337 = vld [vmem:[#allocation10 + $0xe8] sm:$0xff]
    %v338 = vld [vmem:[#allocation10 + $0xf0] sm:$0xff]
    %v339 = vld [vmem:[#allocation10 + $0xf8] sm:$0xff]
    %340 = vmatprep.subr.mxu0 0.0
    %341 = vmatpush1.msra.mxu0 %v323
    %342 = vmatprep.subr.mxu0 0.0
    %343 = vmatpush1.msra.mxu0 %v322
    %344 = vmatprep.subr.mxu0 0.0
    %345 = vmatpush1.msra.mxu0 %v321
    %346 = vmatprep.subr.mxu0 0.0
    %347 = vmatpush1.msra.mxu0 %v320
    %348 = vmatprep.subr.mxu0 0.0
    %349 = vmatpush1.msra.mxu0 %v319
    %350 = vmatprep.subr.mxu0 0.0
    %351 = vmatpush1.msra.mxu0 %v318
    %352 = vmatprep.subr.mxu0 0.0
    %353 = vmatpush1.msra.mxu0 %v317
    %354 = vmatprep.subr.mxu0 0.0
    %355 = vmatpush1.msra.mxu0 %v316
    %356 = vmatprep.subr.mxu0 0.0
    %357 = vmatpush1.msra.mxu0 %v315
    %358 = vmatprep.subr.mxu0 0.0
    %359 = vmatpush1.msra.mxu0 %v314
    %360 = vmatprep.subr.mxu0 0.0
    %361 = vmatpush1.msra.mxu0 %v313
    %362 = vmatprep.subr.mxu0 0.0
    %363 = vmatpush1.msra.mxu0 %v312
    %364 = vmatprep.subr.mxu0 0.0
    %365 = vmatpush1.msra.mxu0 %v311
    %366 = vmatprep.subr.mxu0 0.0
    %367 = vmatpush1.msra.mxu0 %v310
    %368 = vmatprep.subr.mxu0 0.0
    %369 = vmatpush1.msra.mxu0 %v309
    %370 = vmatprep.subr.mxu0 0.0
    %371 = vmatpush1.msra.mxu0 %v308
    %372 = vmatprep.subr.mxu0 0.0
    %373 = vmatpush2.msra.mxu0 %v339
    %374 = vmatprep.subr.mxu0 0.0
    %375 = vmatpush2.msra.mxu0 %v338
    %376 = vmatprep.subr.mxu0 0.0
    %377 = vmatpush2.msra.mxu0 %v337
    %378 = vmatprep.subr.mxu0 0.0
    %379 = vmatpush2.msra.mxu0 %v336
    %380 = vmatprep.subr.mxu0 0.0
    %381 = vmatpush2.msra.mxu0 %v335
    %382 = vmatprep.subr.mxu0 0.0
    %383 = vmatpush2.msra.mxu0 %v334
    %384 = vmatprep.subr.mxu0 0.0
    %385 = vmatpush2.msra.mxu0 %v333
    %386 = vmatprep.subr.mxu0 0.0
    %387 = vmatpush2.msra.mxu0 %v332
    %388 = vmatprep.subr.mxu0 0.0
    %389 = vmatpush2.msra.mxu0 %v331
    %390 = vmatprep.subr.mxu0 0.0
    %391 = vmatpush2.msra.mxu0 %v330
    %392 = vmatprep.subr.mxu0 0.0
    %393 = vmatpush2.msra.mxu0 %v329
    %394 = vmatprep.subr.mxu0 0.0
    %395 = vmatpush2.msra.mxu0 %v328
    %396 = vmatprep.subr.mxu0 0.0
    %397 = vmatpush2.msra.mxu0 %v327
    %398 = vmatprep.subr.mxu0 0.0
    %399 = vmatpush2.msra.mxu0 %v326
    %400 = vmatprep.subr.mxu0 0.0
    %401 = vmatpush2.msra.mxu0 %v325
    %402 = vmatprep.subr.mxu0 0.0
    %403 = vmatpush2.msra.mxu0 %v324
    %404 = vmatprep.mubr.f32.mxu0 %v307
    %405 = vmatmul.mubr.f32.gmra.mxu0 %v306
    %v406 = vpop.f32.mrf.mxu0
    %v407 = vadd.f32 0.0, %v406
    %v408 = vpop.f32.mrf.mxu0
    %409 = vdwg.mxu0
    %410 = vst [vmem:[#allocation11] sm:$0xff] %v407
    // Predicated region
    $region50: #{tpu_custom_call.1} parent=1 // pred_check
      _
    $region51: #{tpu_custom_call.1} parent=1 // pred_check_branch
      %412 = sbr.rel (0) target = $region53
    $region52: #{tpu_custom_call.1} parent=1 // pred_region
      %s414 = ssub.s32 128, 128
      %415 = vsyncadd [#allocation4], %s414
      %s417 = sshll.u32 [#allocation11], 4
      %s418 = int_to_ptr.vmem [resolvable:$true] %s417
      %420 = dma.vmem_to_hbm [thread:$0]  %s418, 128, %s7, [#allocation4]
    $region53: #{tpu_custom_call.1} parent=1 // pred_fallthru
      _
    // Predicated region
    $region54: #{tpu_custom_call.1} parent=1 // pred_check
      _
    $region55: #{tpu_custom_call.1} parent=1 // pred_check_branch
      %422 = sbr.rel (0) target = $region57
    $region56: #{tpu_custom_call.1} parent=1 // pred_region
      %423 = dma.done [#allocation4], 128
    $region57: #{tpu_custom_call.1} parent=1 // pred_fallthru
      _
    %424 = vsyncpa [#allocation3], 1
    %425 = vsyncpa [#allocation6], 1
    %426 = vsyncpa [#allocation9], 1
    %427 = vsyncpa [#allocation4], 1

</llo_original>
